<compile_context>
chip_gen: v7x
topology: tpu7x:2x2x1
jax: 0.10.0
libtpu: 0.0.40
codegen_flags: <defaults>
</compile_context>

<pallas_src>
import jax
import jax.numpy as jnp
from jax import lax
from jax.experimental import pallas as pl
from jax.experimental.pallas import tpu as pltpu


def _round_up(x, m):
    return (x + m - 1) // m * m


# ----------------------------- Pallas kernel --------------------------------
def value_model_kernel(intent_ref, price_ref, pmask_ref, extra_ref,
                       w1i_ref, w1p_ref, w1x_ref, b1_ref,
                       w2_ref, b2_ref, w3_ref, b3_ref, out_ref):
    """Fused (embedding-folded encoder MLP + value head) for one batch tile.

    intent: [TB, 1] int32      w1i: [NI, Hp] bf16  (= emb @ w1[:EMB], prefused)
    price/pmask: [TB, 1] f32   w1p: [1, Hp]  f32   (price column of w1, VPU)
    extra: [TB, E] f32         w1x: [E, Hp]  bf16
                               b1:  [1, Hp]  f32
                               w2:  [Hp, Hp] bf16   b2: [1, Hp] f32
                               w3:  [1, Hp]  f32    b3: [1, 1]  f32
    out: [TB, 128] f32  (value broadcast across lanes; wrapper slices col 0)
    """
    tb = intent_ref.shape[0]
    ni = w1i_ref.shape[0]

    # --- fused embedding gather + first linear: one-hot @ (emb @ w1e) --------
    iota = lax.broadcasted_iota(jnp.int32, (tb, ni), 1)
    onehot = (intent_ref[...] == iota).astype(jnp.bfloat16)              # [TB, NI]
    pre = jnp.dot(onehot, w1i_ref[...],
                  preferred_element_type=jnp.float32)                    # [TB, Hp]

    # extra-feature contribution (MXU) and price*mask contribution (VPU, K=1).
    pre = pre + jnp.dot(extra_ref[...].astype(jnp.bfloat16), w1x_ref[...],
                        preferred_element_type=jnp.float32)
    pre = pre + (price_ref[...] * pmask_ref[...]) * w1p_ref[...]
    enc = jnp.tanh(pre + b1_ref[...])                                    # f32 elementwise

    # --- value decoder: relu(enc @ w2 + b2), then <h, w3> + b3 --------------
    h = jnp.maximum(
        jnp.dot(enc.astype(jnp.bfloat16), w2_ref[...],
                preferred_element_type=jnp.float32) + b2_ref[...],
        0.0)
    # H x 1 matmul replaced by VPU multiply + XLU lane reduction.
    v = jnp.sum(h * w3_ref[...], axis=-1, keepdims=True) + b3_ref[...]   # [TB, 1]

    # Lane-dense store: broadcast the per-row value across all 128 lanes.
    out_ref[...] = jnp.broadcast_to(v, out_ref.shape).astype(out_ref.dtype)


# --------------------------- param packing ----------------------------------
def pack_params(params):
    """Pad H to a multiple of 128, split w1 by feature group, pre-fuse the
    embedding into the intent block of w1, cast MXU operands to bf16."""
    emb = params["emb"]
    emb_dim = emb.shape[1]
    w1, b1 = params["w1"], params["b1"]
    w2, b2 = params["w2"], params["b2"]
    w3, b3 = params["w3"], params["b3"]
    H = w1.shape[1]
    Hp = _round_up(H, 128)
    ph = Hp - H
    pad_cols = lambda a: jnp.pad(a, ((0, 0), (0, ph)))

    w1_padded = pad_cols(w1)                                           # [F, Hp]
    # Algebraic fusion (f32, then one bf16 cast): onehot @ (emb @ w1e).
    w1i = (emb.astype(jnp.float32) @ w1_padded[:emb_dim])              # [NI, Hp]
    return {
        "w1i": w1i.astype(jnp.bfloat16),                               # [NI, Hp]
        "w1p": w1_padded[emb_dim:emb_dim + 1],                         # [1, Hp] f32 (VPU)
        "w1x": w1_padded[emb_dim + 1:].astype(jnp.bfloat16),           # [E, Hp]
        "b1": pad_cols(b1),                                            # [1, Hp]
        "w2": jnp.pad(w2, ((0, ph), (0, ph))).astype(jnp.bfloat16),    # [Hp, Hp]
        "b2": pad_cols(b2),                                            # [1, Hp]
        "w3": pad_cols(w3.T),                                          # [1, Hp] f32 (VPU reduce)
        "b3": b3,                                                      # [1, 1]
    }


# ------------------------------ forward -------------------------------------
def value_model_forward(e_intent, e_price, e_pmask, e_extra, kp,
                        fix_encoder=False):
    """ValueModel.forward: value = decoder(encoder(e_intent, e_price, e_pmask, e_extra))."""
    B = e_intent.shape[0]
    NI, Hp = kp["w1i"].shape
    E = e_extra.shape[1]

    if fix_encoder:
        # TODO(synk): original detaches the encoder *output*; with the fused
        # kernel we emulate it by stopping gradients into the encoder params
        # (forward-identical; exact detach-at-enc would need a custom VJP).
        kp = dict(kp)
        for k in ("w1i", "w1p", "w1x", "b1"):
            kp[k] = lax.stop_gradient(kp[k])

    intent = lax.stop_gradient(e_intent).reshape(B, 1).astype(jnp.int32)
    price = e_price.astype(jnp.float32)
    pmask = e_pmask.astype(jnp.float32)
    extra = e_extra.astype(jnp.float32)

    # Batch tiling: pad rows to a sublane multiple; grid over batch tiles.
    TILE_B = min(512, _round_up(B, 8))
    B_pad = _round_up(B, TILE_B)

    def pad_rows(a):
        return jnp.pad(a, ((0, B_pad - a.shape[0]),) + ((0, 0),) * (a.ndim - 1))

    intent, price, pmask, extra = map(pad_rows, (intent, price, pmask, extra))

    grid = (B_pad // TILE_B,)
    batch_spec = lambda d: pl.BlockSpec((TILE_B, d), lambda i: (i, 0))
    const_spec = lambda s: pl.BlockSpec(s, lambda i, _s=s: (0,) * len(_s))  # VMEM-resident

    weight_args = (kp["w1i"], kp["w1p"], kp["w1x"], kp["b1"],
                   kp["w2"], kp["b2"], kp["w3"], kp["b3"])

    flops = 2 * B_pad * (NI * Hp + E * Hp + Hp * Hp + Hp)
    bytes_accessed = int(
        sum(a.size * a.dtype.itemsize
            for a in (intent, price, pmask, extra) + weight_args)
        + B_pad * 128 * 4)

    out = pl.pallas_call(
        value_model_kernel,
        out_shape=jax.ShapeDtypeStruct((B_pad, 128), jnp.float32),
        grid_spec=pltpu.PrefetchScalarGridSpec(
            num_scalar_prefetch=0,
            grid=grid,
            in_specs=[
                batch_spec(1), batch_spec(1), batch_spec(1), batch_spec(E),
                const_spec(kp["w1i"].shape), const_spec(kp["w1p"].shape),
                const_spec(kp["w1x"].shape), const_spec(kp["b1"].shape),
                const_spec(kp["w2"].shape), const_spec(kp["b2"].shape),
                const_spec(kp["w3"].shape), const_spec(kp["b3"].shape),
            ],
            out_specs=pl.BlockSpec((TILE_B, 128), lambda i: (i, 0)),
        ),
        compiler_params=pltpu.CompilerParams(
            dimension_semantics=("parallel",)),  # shard batch tiles across TCs (v7x)
        cost_estimate=pl.CostEstimate(
            flops=flops, transcendentals=B_pad * Hp,
            bytes_accessed=bytes_accessed),
    )(intent, price, pmask, extra, *weight_args)

    return out[:B, :1]


# ----------------------------- param init -----------------------------------
def init_params(key, num_intents, emb_dim, extra_dim, hidden):
    feat = emb_dim + 1 + extra_dim
    ks = jax.random.split(key, 7)
    scale = lambda fan_in: 1.0 / jnp.sqrt(jnp.float32(fan_in))
    return {
        "emb": jax.random.normal(ks[0], (num_intents, emb_dim), jnp.float32) * 0.1,
        "w1": jax.random.normal(ks[1], (feat, hidden), jnp.float32) * scale(feat),
        "b1": jnp.zeros((1, hidden), jnp.float32),
        "w2": jax.random.normal(ks[2], (hidden, hidden), jnp.float32) * scale(hidden),
        "b2": jnp.zeros((1, hidden), jnp.float32),
        "w3": jax.random.normal(ks[3], (hidden, 1), jnp.float32) * scale(hidden),
        "b3": jnp.zeros((1, 1), jnp.float32),
    }


# Pure-JAX f32 reference (original, unquantized weights).
def reference_forward(e_intent, e_price, e_pmask, e_extra, params):
    x = jnp.concatenate(
        [jnp.take(params["emb"], e_intent, axis=0), e_price * e_pmask, e_extra],
        axis=-1).astype(jnp.float32)
    enc = jnp.tanh(x @ params["w1"] + params["b1"])
    h = jnp.maximum(enc @ params["w2"] + params["b2"], 0.0)
    return h @ params["w3"] + params["b3"]


if __name__ == "__main__":
    B = 8
    NUM_INTENTS = 16
    EMB_DIM = 32
    EXTRA_DIM = 12
    HIDDEN = 64

    key = jax.random.PRNGKey(0)
    k_par, k_int, k_price, k_mask, k_extra = jax.random.split(key, 5)

    params = init_params(k_par, NUM_INTENTS, EMB_DIM, EXTRA_DIM, HIDDEN)
    packed = pack_params(params)

    e_intent = jax.random.randint(k_int, (B,), 0, NUM_INTENTS, dtype=jnp.int32)
    e_price = jax.random.uniform(k_price, (B, 1), jnp.float32)
    e_pmask = (jax.random.uniform(k_mask, (B, 1)) > 0.3).astype(jnp.float32)
    e_extra = jax.random.normal(k_extra, (B, EXTRA_DIM), jnp.float32)

    value = value_model_forward(e_intent, e_price, e_pmask, e_extra, packed,
                                fix_encoder=True)
    value = jax.block_until_ready(value)

    ref = reference_forward(e_intent, e_price, e_pmask, e_extra, params)
    assert value.shape == (B, 1)
    # bf16 matmul operands vs f32 reference -> bf16-appropriate tolerance.
    assert jnp.allclose(value, ref, atol=2e-2, rtol=2e-2), (
        float(jnp.max(jnp.abs(value - ref))))

    print("KERNEL_OK")
</pallas_src>

<mosaic_0001>
module attributes {stable_mosaic.version = 11 : i64} {
  func.func @value_model_kernel(%arg0: i32, %arg1: memref<8x1xi32, #tpu.memory_space<vmem>>, %arg2: memref<8x1xf32, #tpu.memory_space<vmem>>, %arg3: memref<8x1xf32, #tpu.memory_space<vmem>>, %arg4: memref<8x12xf32, #tpu.memory_space<vmem>>, %arg5: memref<16x128xbf16, #tpu.memory_space<vmem>>, %arg6: memref<1x128xf32, #tpu.memory_space<vmem>>, %arg7: memref<12x128xbf16, #tpu.memory_space<vmem>>, %arg8: memref<1x128xf32, #tpu.memory_space<vmem>>, %arg9: memref<128x128xbf16, #tpu.memory_space<vmem>>, %arg10: memref<1x128xf32, #tpu.memory_space<vmem>>, %arg11: memref<1x128xf32, #tpu.memory_space<vmem>>, %arg12: memref<1x1xf32, #tpu.memory_space<vmem>>, %arg13: memref<8x128xf32, #tpu.memory_space<vmem>>) attributes {dimension_semantics = [#tpu.dimension_semantics<parallel>], iteration_bounds = array<i64: 1>, scalar_prefetch = 0 : i64, scratch_operands = 0 : i64, tpu.core_type = #tpu.core_type<tc>, window_params = [{transform_indices = @transform_0, window_bounds = array<i64: 8, 1>}, {transform_indices = @transform_1, window_bounds = array<i64: 8, 1>}, {transform_indices = @transform_2, window_bounds = array<i64: 8, 1>}, {transform_indices = @transform_3, window_bounds = array<i64: 8, 12>}, {pipeline_mode = #tpu.pipeline_mode<synchronous>, transform_indices = @transform_4, window_bounds = array<i64: 16, 128>}, {pipeline_mode = #tpu.pipeline_mode<synchronous>, transform_indices = @transform_5, window_bounds = array<i64: 1, 128>}, {pipeline_mode = #tpu.pipeline_mode<synchronous>, transform_indices = @transform_6, window_bounds = array<i64: 12, 128>}, {pipeline_mode = #tpu.pipeline_mode<synchronous>, transform_indices = @transform_7, window_bounds = array<i64: 1, 128>}, {pipeline_mode = #tpu.pipeline_mode<synchronous>, transform_indices = @transform_8, window_bounds = array<i64: 128, 128>}, {pipeline_mode = #tpu.pipeline_mode<synchronous>, transform_indices = @transform_9, window_bounds = array<i64: 1, 128>}, {pipeline_mode = #tpu.pipeline_mode<synchronous>, transform_indices = @transform_10, window_bounds = array<i64: 1, 128>}, {pipeline_mode = #tpu.pipeline_mode<synchronous>, transform_indices = @transform_11, window_bounds = array<i64: 1, 1>}, {transform_indices = @transform_12, window_bounds = array<i64: 8, 128>}]} {
    %0 = tpu.iota {dimensions = array<i32: 1>} : vector<8x16xi32>
    %c0 = arith.constant 0 : index
    %c0_0 = arith.constant 0 : index
    %1 = vector.load %arg1[%c0, %c0_0] : memref<8x1xi32, #tpu.memory_space<vmem>>, vector<8x1xi32>
    %2 = vector.broadcast %1 : vector<8x1xi32> to vector<8x16xi32>
    %3 = arith.cmpi eq, %2, %0 : vector<8x16xi32>
    %4 = arith.extui %3 : vector<8x16xi1> to vector<8x16xi32>
    %5 = arith.sitofp %4 : vector<8x16xi32> to vector<8x16xf32>
    %6 = arith.truncf %5 : vector<8x16xf32> to vector<8x16xbf16>
    %c0_1 = arith.constant 0 : index
    %c0_2 = arith.constant 0 : index
    %7 = vector.load %arg5[%c0_1, %c0_2] : memref<16x128xbf16, #tpu.memory_space<vmem>>, vector<16x128xbf16>
    %cst = arith.constant dense<0.000000e+00> : vector<8x128xf32>
    %8 = tpu.matmul %6, %7, %cst {dimension_numbers = #tpu.dot_dimension_numbers<[1], [0], [0], [1], [0, 0, 1, 1], [], []>} : vector<8x16xbf16>, vector<16x128xbf16>, vector<8x128xf32> -> vector<8x128xf32>
    %c0_3 = arith.constant 0 : index
    %c0_4 = arith.constant 0 : index
    %9 = vector.load %arg4[%c0_3, %c0_4] : memref<8x12xf32, #tpu.memory_space<vmem>>, vector<8x12xf32>
    %10 = arith.truncf %9 : vector<8x12xf32> to vector<8x12xbf16>
    %c0_5 = arith.constant 0 : index
    %c0_6 = arith.constant 0 : index
    %11 = vector.load %arg7[%c0_5, %c0_6] : memref<12x128xbf16, #tpu.memory_space<vmem>>, vector<12x128xbf16>
    %cst_7 = arith.constant dense<0.000000e+00> : vector<8x128xf32>
    %12 = tpu.matmul %10, %11, %cst_7 {dimension_numbers = #tpu.dot_dimension_numbers<[1], [0], [0], [1], [0, 0, 1, 1], [], []>} : vector<8x12xbf16>, vector<12x128xbf16>, vector<8x128xf32> -> vector<8x128xf32>
    %13 = arith.addf %8, %12 : vector<8x128xf32>
    %c0_8 = arith.constant 0 : index
    %c0_9 = arith.constant 0 : index
    %14 = vector.load %arg2[%c0_8, %c0_9] : memref<8x1xf32, #tpu.memory_space<vmem>>, vector<8x1xf32>
    %c0_10 = arith.constant 0 : index
    %c0_11 = arith.constant 0 : index
    %15 = vector.load %arg3[%c0_10, %c0_11] : memref<8x1xf32, #tpu.memory_space<vmem>>, vector<8x1xf32>
    %16 = arith.mulf %14, %15 : vector<8x1xf32>
    %c0_12 = arith.constant 0 : index
    %c0_13 = arith.constant 0 : index
    %17 = vector.load %arg6[%c0_12, %c0_13] : memref<1x128xf32, #tpu.memory_space<vmem>>, vector<1x128xf32>
    %18 = vector.broadcast %16 : vector<8x1xf32> to vector<8x128xf32>
    %19 = vector.broadcast %17 : vector<1x128xf32> to vector<8x128xf32>
    %20 = arith.mulf %18, %19 : vector<8x128xf32>
    %21 = arith.addf %13, %20 : vector<8x128xf32>
    %c0_14 = arith.constant 0 : index
    %c0_15 = arith.constant 0 : index
    %22 = vector.load %arg8[%c0_14, %c0_15] : memref<1x128xf32, #tpu.memory_space<vmem>>, vector<1x128xf32>
    %23 = vector.broadcast %22 : vector<1x128xf32> to vector<8x128xf32>
    %24 = arith.addf %21, %23 : vector<8x128xf32>
    %25 = math.tanh %24 : vector<8x128xf32>
    %26 = arith.truncf %25 : vector<8x128xf32> to vector<8x128xbf16>
    %c0_16 = arith.constant 0 : index
    %c0_17 = arith.constant 0 : index
    %27 = vector.load %arg9[%c0_16, %c0_17] : memref<128x128xbf16, #tpu.memory_space<vmem>>, vector<128x128xbf16>
    %cst_18 = arith.constant dense<0.000000e+00> : vector<8x128xf32>
    %28 = tpu.matmul %26, %27, %cst_18 {dimension_numbers = #tpu.dot_dimension_numbers<[1], [0], [0], [1], [0, 0, 1, 1], [], []>} : vector<8x128xbf16>, vector<128x128xbf16>, vector<8x128xf32> -> vector<8x128xf32>
    %c0_19 = arith.constant 0 : index
    %c0_20 = arith.constant 0 : index
    %29 = vector.load %arg10[%c0_19, %c0_20] : memref<1x128xf32, #tpu.memory_space<vmem>>, vector<1x128xf32>
    %30 = vector.broadcast %29 : vector<1x128xf32> to vector<8x128xf32>
    %31 = arith.addf %28, %30 : vector<8x128xf32>
    %cst_21 = arith.constant 0.000000e+00 : f32
    %32 = vector.broadcast %cst_21 : f32 to vector<8x128xf32>
    %33 = arith.maximumf %31, %32 : vector<8x128xf32>
    %c0_22 = arith.constant 0 : index
    %c0_23 = arith.constant 0 : index
    %34 = vector.load %arg11[%c0_22, %c0_23] : memref<1x128xf32, #tpu.memory_space<vmem>>, vector<1x128xf32>
    %35 = vector.broadcast %34 : vector<1x128xf32> to vector<8x128xf32>
    %36 = arith.mulf %33, %35 : vector<8x128xf32>
    %cst_24 = arith.constant dense<0.000000e+00> : vector<8xf32>
    %37 = vector.multi_reduction <add>, %36, %cst_24 [1] : vector<8x128xf32> to vector<8xf32>
    %38 = vector.shape_cast %37 : vector<8xf32> to vector<8x1xf32>
    %c0_25 = arith.constant 0 : index
    %c0_26 = arith.constant 0 : index
    %39 = vector.load %arg12[%c0_25, %c0_26] : memref<1x1xf32, #tpu.memory_space<vmem>>, vector<1x1xf32>
    %40 = vector.broadcast %39 : vector<1x1xf32> to vector<8x1xf32>
    %41 = arith.addf %38, %40 : vector<8x1xf32>
    %42 = vector.shape_cast %41 : vector<8x1xf32> to vector<8x1xf32>
    %43 = vector.broadcast %42 : vector<8x1xf32> to vector<8x128xf32>
    %c0_27 = arith.constant 0 : index
    %c0_28 = arith.constant 0 : index
    %44 = vector.load %arg13[%c0_27, %c0_28] : memref<8x128xf32, #tpu.memory_space<vmem>>, vector<8x128xf32>
    tpu.vector_store %arg13[%c0_27, %c0_28], %43 {strides = array<i32>} : memref<8x128xf32, #tpu.memory_space<vmem>>, vector<8x128xf32>,
    return
  }
  func.func @transform_0(%arg0: i32) -> (i32, i32) {
    %c0_i32 = arith.constant 0 : i32
    %c0_i32_0 = arith.constant 0 : i32
    return %arg0, %c0_i32 : i32, i32
  }
  func.func @transform_1(%arg0: i32) -> (i32, i32) {
    %c0_i32 = arith.constant 0 : i32
    %c0_i32_0 = arith.constant 0 : i32
    return %arg0, %c0_i32 : i32, i32
  }
  func.func @transform_2(%arg0: i32) -> (i32, i32) {
    %c0_i32 = arith.constant 0 : i32
    %c0_i32_0 = arith.constant 0 : i32
    return %arg0, %c0_i32 : i32, i32
  }
  func.func @transform_3(%arg0: i32) -> (i32, i32) {
    %c0_i32 = arith.constant 0 : i32
    %c0_i32_0 = arith.constant 0 : i32
    return %arg0, %c0_i32 : i32, i32
  }
  func.func @transform_4(%arg0: i32) -> (i32, i32) {
    %c0_i32 = arith.constant 0 : i32
    %c0_i32_0 = arith.constant 0 : i32
    %c0_i32_1 = arith.constant 0 : i32
    return %c0_i32, %c0_i32_0 : i32, i32
  }
  func.func @transform_5(%arg0: i32) -> (i32, i32) {
    %c0_i32 = arith.constant 0 : i32
    %c0_i32_0 = arith.constant 0 : i32
    %c0_i32_1 = arith.constant 0 : i32
    return %c0_i32, %c0_i32_0 : i32, i32
  }
  func.func @transform_6(%arg0: i32) -> (i32, i32) {
    %c0_i32 = arith.constant 0 : i32
    %c0_i32_0 = arith.constant 0 : i32
    %c0_i32_1 = arith.constant 0 : i32
    return %c0_i32, %c0_i32_0 : i32, i32
  }
  func.func @transform_7(%arg0: i32) -> (i32, i32) {
    %c0_i32 = arith.constant 0 : i32
    %c0_i32_0 = arith.constant 0 : i32
    %c0_i32_1 = arith.constant 0 : i32
    return %c0_i32, %c0_i32_0 : i32, i32
  }
  func.func @transform_8(%arg0: i32) -> (i32, i32) {
    %c0_i32 = arith.constant 0 : i32
    %c0_i32_0 = arith.constant 0 : i32
    %c0_i32_1 = arith.constant 0 : i32
    return %c0_i32, %c0_i32_0 : i32, i32
  }
  func.func @transform_9(%arg0: i32) -> (i32, i32) {
    %c0_i32 = arith.constant 0 : i32
    %c0_i32_0 = arith.constant 0 : i32
    %c0_i32_1 = arith.constant 0 : i32
    return %c0_i32, %c0_i32_0 : i32, i32
  }
  func.func @transform_10(%arg0: i32) -> (i32, i32) {
    %c0_i32 = arith.constant 0 : i32
    %c0_i32_0 = arith.constant 0 : i32
    %c0_i32_1 = arith.constant 0 : i32
    return %c0_i32, %c0_i32_0 : i32, i32
  }
  func.func @transform_11(%arg0: i32) -> (i32, i32) {
    %c0_i32 = arith.constant 0 : i32
    %c0_i32_0 = arith.constant 0 : i32
    %c0_i32_1 = arith.constant 0 : i32
    return %c0_i32, %c0_i32_0 : i32, i32
  }
  func.func @transform_12(%arg0: i32) -> (i32, i32) {
    %c0_i32 = arith.constant 0 : i32
    %c0_i32_0 = arith.constant 0 : i32
    return %arg0, %c0_i32 : i32, i32
  }
}

</mosaic_0001>

<llo_original>
// kernel: tpu_custom_call.1
$region0: #{tpu_custom_call.1}
  #allocation0 [shape = 'u32[]', space=smem, size = 0x4, offset = 0x4, fixed_abs, tag = 'smem constant byte address 0x4 - core index']
  #allocation1 [shape = 'u32[144,128]{1,0:T(1,128)}', space=vmem, size = 0x12000, scoped, tag = 'internal scratch']
  #allocation2 [shape = 'f32[1,1]{1,0:T(1,128)S(1)}', space=vmem, size = 0x200, scoped, tag = 'scoped memory for tpu_custom_call.1']
  %s0 = inlined_call_operand.vmem [shape: s32[8,1], index: 0, kind: input, shape index: {}]
  %s1 = inlined_call_operand.vmem [shape: f32[8,1], index: 1, kind: input, shape index: {}]
  %s2 = inlined_call_operand.vmem [shape: f32[8,1], index: 2, kind: input, shape index: {}]
  %s3 = inlined_call_operand.vmem [shape: f32[8,12], index: 3, kind: input, shape index: {}]
  %s4 = inlined_call_operand.vmem [shape: bf16[16,128], index: 4, kind: input, shape index: {}]
  %s5 = inlined_call_operand.vmem [shape: f32[1,128], index: 5, kind: input, shape index: {}]
  %s6 = inlined_call_operand.vmem [shape: bf16[12,128], index: 6, kind: input, shape index: {}]
  %s7 = inlined_call_operand.vmem [shape: f32[1,128], index: 7, kind: input, shape index: {}]
  %s8 = inlined_call_operand.hbm [shape: bf16[128,128], index: 8, kind: input, shape index: {}]
  %s9 = inlined_call_operand.vmem [shape: f32[1,128], index: 9, kind: input, shape index: {}]
  %s10 = inlined_call_operand.vmem [shape: f32[1,128], index: 10, kind: input, shape index: {}]
  %s11 = inlined_call_operand.<no memory space> [shape: f32[1,1], index: 11, kind: input, shape index: {}]
  %s12 = inlined_call_operand.hbm [shape: f32[8,128], index: 12, kind: output, shape index: {}]
  %s13 = sld [smem:[#allocation0]]
  $region62: #{tpu_custom_call.1} parent=0
    _
  %s15 = ssub.s32 1, %s13
  %s16 = scalar_select 0, %s15, %s13
  %v17 = vstv %s11
  %18 = vst [vmem:[#allocation2] sm:$0x1] %v17
  $region1: #{tpu_custom_call.1} parent=0
    #allocation3 [shape = 'u8[32768]{0}', space=vmem, size = 0x8000, scoped, tag = 'input window, operand 8, single buffered']
    #allocation4 [shape = 's32[1]{0}', space=sflag, size = 0x4, scoped, tag = 'scoped memory for tpu_custom_call.1']
    #allocation5 [shape = 's32[1]{0}', space=sflag, size = 0x4, scoped, tag = 'scoped memory for tpu_custom_call.1']
    #allocation6 [shape = 'u8[4096]{0}', space=vmem, size = 0x1000, scoped, tag = 'output window, operand 0, single buffered']
    %19 = vsyncpa [#allocation4], 0
    %20 = vsyncpa [#allocation5], 0
    // Predicated region
    $region2: #{tpu_custom_call.1} parent=1 // pred_check
      _
    $region3: #{tpu_custom_call.1} parent=1 // pred_check_branch
      %22 = sbr.rel (0) target = $region5
    $region4: #{tpu_custom_call.1} parent=1 // pred_region
      _
    $region5: #{tpu_custom_call.1} parent=1 // pred_fallthru
      _
    // Predicated region
    $region6: #{tpu_custom_call.1} parent=1 // pred_check
      _
    $region7: #{tpu_custom_call.1} parent=1 // pred_check_branch
      %24 = sbr.rel (0) target = $region9
    $region8: #{tpu_custom_call.1} parent=1 // pred_region
      _
    $region9: #{tpu_custom_call.1} parent=1 // pred_fallthru
      _
    // Predicated region
    $region10: #{tpu_custom_call.1} parent=1 // pred_check
      _
    $region11: #{tpu_custom_call.1} parent=1 // pred_check_branch
      %26 = sbr.rel (0) target = $region13
    $region12: #{tpu_custom_call.1} parent=1 // pred_region
      _
    $region13: #{tpu_custom_call.1} parent=1 // pred_fallthru
      _
    // Predicated region
    $region14: #{tpu_custom_call.1} parent=1 // pred_check
      _
    $region15: #{tpu_custom_call.1} parent=1 // pred_check_branch
      %28 = sbr.rel (0) target = $region17
    $region16: #{tpu_custom_call.1} parent=1 // pred_region
      _
    $region17: #{tpu_custom_call.1} parent=1 // pred_fallthru
      _
    // Predicated region
    $region18: #{tpu_custom_call.1} parent=1 // pred_check
      _
    $region19: #{tpu_custom_call.1} parent=1 // pred_check_branch
      %30 = sbr.rel (0) target = $region21
    $region20: #{tpu_custom_call.1} parent=1 // pred_region
      _
    $region21: #{tpu_custom_call.1} parent=1 // pred_fallthru
      _
    // Predicated region
    $region22: #{tpu_custom_call.1} parent=1 // pred_check
      _
    $region23: #{tpu_custom_call.1} parent=1 // pred_check_branch
      %32 = sbr.rel (0) target = $region25
    $region24: #{tpu_custom_call.1} parent=1 // pred_region
      _
    $region25: #{tpu_custom_call.1} parent=1 // pred_fallthru
      _
    // Predicated region
    $region26: #{tpu_custom_call.1} parent=1 // pred_check
      _
    $region27: #{tpu_custom_call.1} parent=1 // pred_check_branch
      %34 = sbr.rel (0) target = $region29
    $region28: #{tpu_custom_call.1} parent=1 // pred_region
      _
    $region29: #{tpu_custom_call.1} parent=1 // pred_fallthru
      _
    // Predicated region
    $region30: #{tpu_custom_call.1} parent=1 // pred_check
      _
    $region31: #{tpu_custom_call.1} parent=1 // pred_check_branch
      %36 = sbr.rel (0) target = $region33
    $region32: #{tpu_custom_call.1} parent=1 // pred_region
      _
    $region33: #{tpu_custom_call.1} parent=1 // pred_fallthru
      _
    // Predicated region
    $region34: #{tpu_custom_call.1} parent=1 // pred_check
      _
    $region35: #{tpu_custom_call.1} parent=1 // pred_check_branch
      %38 = sbr.rel (0) target = $region37
    $region36: #{tpu_custom_call.1} parent=1 // pred_region
      %s40 = ssub.s32 1024, 1024
      %41 = vsyncadd [#allocation4], %s40
      %s42 = sshll.u32 [#allocation3], 4
      %s43 = int_to_ptr.vmem [resolvable:$true] %s42
      %48 = dma.hbm_to_vmem [thread:$0]  %s8, 1024, %s43, [#allocation4], 64, 64, 4
    $region37: #{tpu_custom_call.1} parent=1 // pred_fallthru
      _
    // Predicated region
    $region38: #{tpu_custom_call.1} parent=1 // pred_check
      _
    $region39: #{tpu_custom_call.1} parent=1 // pred_check_branch
      %50 = sbr.rel (0) target = $region41
    $region40: #{tpu_custom_call.1} parent=1 // pred_region
      _
    $region41: #{tpu_custom_call.1} parent=1 // pred_fallthru
      _
    // Predicated region
    $region42: #{tpu_custom_call.1} parent=1 // pred_check
      _
    $region43: #{tpu_custom_call.1} parent=1 // pred_check_branch
      %52 = sbr.rel (0) target = $region45
    $region44: #{tpu_custom_call.1} parent=1 // pred_region
      _
    $region45: #{tpu_custom_call.1} parent=1 // pred_fallthru
      _
    // Predicated region
    $region46: #{tpu_custom_call.1} parent=1 // pred_check
      _
    $region47: #{tpu_custom_call.1} parent=1 // pred_check_branch
      %54 = sbr.rel (0) target = $region49
    $region48: #{tpu_custom_call.1} parent=1 // pred_region
      _
    $region49: #{tpu_custom_call.1} parent=1 // pred_fallthru
      _
    // Predicated region
    $region50: #{tpu_custom_call.1} parent=1 // pred_check
      _
    $region51: #{tpu_custom_call.1} parent=1 // pred_check_branch
      %56 = sbr.rel (0) target = $region53
    $region52: #{tpu_custom_call.1} parent=1 // pred_region
      %57 = dma.done [#allocation4], 1024
    $region53: #{tpu_custom_call.1} parent=1 // pred_fallthru
      _
    %v59 = vlaneseq
    %v60 = vand.u32 %v59, 127
    %v61 = vld [vmem:[%s0] sm:$0xff]
    %62 = vset.pattern.permute.xlu0 0
    %63 = vperm.xlu0 %62, %v61
    %v64 = vpop.permute.xlu0 %63
    %vm65 = vcmp.eq.s32.totalorder %v64, %v60
    %v66 = vsel %vm65, 1, 0
    %v67 = vcvt.s32.f32 %v66
    %v68 = vpack.c.bf16 %v67, %v67
    %v69 = vld [vmem:[%s4] sm:$0xf]
    %v70 = vld [vmem:[%s4 + $0x4] sm:$0xf]
    %v71 = vld [vmem:[%s3] sm:$0xff]
    %v72 = vpack.c.bf16 %v71, %v71
    %v73 = vld [vmem:[%s6] sm:$0xf]
    %v74 = vld [vmem:[%s6 + $0x4] sm:$0x3]
    %v77 = vunpack.c.l.b16 %v73
    %v78 = vunpack.c.l.b16 %v74
    %v79 = vpack.c.b16 %v78, %v77
    %vm80 = vcmask 97280
    %v82 = vsel %vm80, %v72, 0
    %vm84 = vcmask 1045504
    %v86 = vsel %vm84, %v79, 0
    %88 = vmatprep.subr.bf16.mxu0 0
    %89 = vmatpush1.bf16.msra.mxu0 %v86
    %90 = vmatprep.subr.bf16.mxu0 0
    %91 = vmatpush1.bf16.msra.mxu0 0
    %92 = vmatprep.subr.bf16.mxu0 0
    %93 = vmatpush1.bf16.msra.mxu0 0
    %94 = vmatprep.subr.bf16.mxu0 0
    %95 = vmatpush1.bf16.msra.mxu0 0
    %96 = vmatprep.subr.bf16.mxu0 0
    %97 = vmatpush1.bf16.msra.mxu0 0
    %98 = vmatprep.subr.bf16.mxu0 0
    %99 = vmatpush1.bf16.msra.mxu0 0
    %100 = vmatprep.subr.bf16.mxu0 0
    %101 = vmatpush1.bf16.msra.mxu0 0
    %102 = vmatprep.subr.bf16.mxu0 0
    %103 = vmatpush1.bf16.msra.mxu0 0
    %104 = vmatprep.subr.bf16.mxu0 0
    %105 = vmatpush1.bf16.msra.mxu0 0
    %106 = vmatprep.subr.bf16.mxu0 0
    %107 = vmatpush1.bf16.msra.mxu0 0
    %108 = vmatprep.subr.bf16.mxu0 0
    %109 = vmatpush1.bf16.msra.mxu0 0
    %110 = vmatprep.subr.bf16.mxu0 0
    %111 = vmatpush1.bf16.msra.mxu0 0
    %112 = vmatprep.subr.bf16.mxu0 0
    %113 = vmatpush1.bf16.msra.mxu0 0
    %114 = vmatprep.subr.bf16.mxu0 0
    %115 = vmatpush1.bf16.msra.mxu0 0
    %116 = vmatprep.subr.bf16.mxu0 0
    %117 = vmatpush1.bf16.msra.mxu0 0
    %118 = vmatprep.subr.bf16.mxu0 0
    %119 = vmatpush1.bf16.msra.mxu0 0
    %120 = vmatprep.mubr.bf16.mxu0 0
    %121 = vmatmul.mubr.bf16.gmra.mrb[0].mxu0 %v82
    %v122 = vpop.f32.mrb[0].mxu0
    %v123 = vadd.f32 0.0, %v122
    %v124 = vpop.f32.mrb[0].mxu0
    %v125 = vpop.f32.mrb[0].mxu0
    %v126 = vpop.f32.mrb[0].mxu0
    %127 = vdwg.mxu0
    %v130 = vunpack.c.l.b16 %v69
    %v131 = vunpack.c.l.b16 %v70
    %v132 = vpack.c.b16 %v131, %v130
    %vm134 = vcmask 130048
    %v136 = vsel %vm134, %v68, 0
    %138 = vmatprep.subr.bf16.mxu0 0
    %139 = vmatpush1.bf16.msra.mxu0 %v132
    %140 = vmatprep.subr.bf16.mxu0 0
    %141 = vmatpush1.bf16.msra.mxu0 0
    %142 = vmatprep.subr.bf16.mxu0 0
    %143 = vmatpush1.bf16.msra.mxu0 0
    %144 = vmatprep.subr.bf16.mxu0 0
    %145 = vmatpush1.bf16.msra.mxu0 0
    %146 = vmatprep.subr.bf16.mxu0 0
    %147 = vmatpush1.bf16.msra.mxu0 0
    %148 = vmatprep.subr.bf16.mxu0 0
    %149 = vmatpush1.bf16.msra.mxu0 0
    %150 = vmatprep.subr.bf16.mxu0 0
    %151 = vmatpush1.bf16.msra.mxu0 0
    %152 = vmatprep.subr.bf16.mxu0 0
    %153 = vmatpush1.bf16.msra.mxu0 0
    %154 = vmatprep.subr.bf16.mxu0 0
    %155 = vmatpush1.bf16.msra.mxu0 0
    %156 = vmatprep.subr.bf16.mxu0 0
    %157 = vmatpush1.bf16.msra.mxu0 0
    %158 = vmatprep.subr.bf16.mxu0 0
    %159 = vmatpush1.bf16.msra.mxu0 0
    %160 = vmatprep.subr.bf16.mxu0 0
    %161 = vmatpush1.bf16.msra.mxu0 0
    %162 = vmatprep.subr.bf16.mxu0 0
    %163 = vmatpush1.bf16.msra.mxu0 0
    %164 = vmatprep.subr.bf16.mxu0 0
    %165 = vmatpush1.bf16.msra.mxu0 0
    %166 = vmatprep.subr.bf16.mxu0 0
    %167 = vmatpush1.bf16.msra.mxu0 0
    %168 = vmatprep.subr.bf16.mxu0 0
    %169 = vmatpush1.bf16.msra.mxu0 0
    %170 = vmatprep.mubr.bf16.mxu0 0
    %171 = vmatmul.mubr.bf16.gmra.mrb[0].mxu0 %v136
    %v172 = vpop.f32.mrb[0].mxu0
    %v173 = vadd.f32 %v123, %v172
    %v174 = vpop.f32.mrb[0].mxu0
    %v175 = vpop.f32.mrb[0].mxu0
    %v176 = vpop.f32.mrb[0].mxu0
    %177 = vdwg.mxu0
    %v178 = vld [vmem:[%s1] sm:$0xff]
    %v179 = vld [vmem:[%s2] sm:$0xff]
    %v180 = vmul.f32 %v178, %v179
    %v181 = vld [vmem:[%s5] sm:$0x1]
    %183 = vset.pattern.permute.xlu0 0
    %184 = vperm.xlu0 %183, %v180
    %v185 = vpop.permute.xlu0 %184
    %v188 = vlaneseq
    %v189 = vshrl.u32 %v188, 7
    %v190 = vsub.s32 0, %v189
    %v191 = vrot.slane %v181, %v190
    %v193 = vmul.f32 %v185, %v191
    %v194 = vadd.f32 %v173, %v193
    %v195 = vld [vmem:[%s7] sm:$0x1]
    %v197 = vlaneseq
    %v198 = vshrl.u32 %v197, 7
    %v199 = vsub.s32 0, %v198
    %v200 = vrot.slane %v195, %v199
    %v202 = vadd.f32 %v194, %v200
    %v203 = vtanh.pop %v202
    %v204 = vpack.c.bf16 %v203, %v203
    %v205 = vld [vmem:[#allocation3] sm:$0xf]
    %v206 = vld [vmem:[#allocation3 + $0x4] sm:$0xf]
    %v207 = vld [vmem:[#allocation3 + $0x8] sm:$0xf]
    %v208 = vld [vmem:[#allocation3 + $0xc] sm:$0xf]
    %v209 = vld [vmem:[#allocation3 + $0x10] sm:$0xf]
    %v210 = vld [vmem:[#allocation3 + $0x14] sm:$0xf]
    %v211 = vld [vmem:[#allocation3 + $0x18] sm:$0xf]
    %v212 = vld [vmem:[#allocation3 + $0x1c] sm:$0xf]
    %v213 = vld [vmem:[#allocation3 + $0x20] sm:$0xf]
    %v214 = vld [vmem:[#allocation3 + $0x24] sm:$0xf]
    %v215 = vld [vmem:[#allocation3 + $0x28] sm:$0xf]
    %v216 = vld [vmem:[#allocation3 + $0x2c] sm:$0xf]
    %v217 = vld [vmem:[#allocation3 + $0x30] sm:$0xf]
    %v218 = vld [vmem:[#allocation3 + $0x34] sm:$0xf]
    %v219 = vld [vmem:[#allocation3 + $0x38] sm:$0xf]
    %v220 = vld [vmem:[#allocation3 + $0x3c] sm:$0xf]
    %v221 = vld [vmem:[%s9] sm:$0x1]
    %v223 = vlaneseq
    %v224 = vshrl.u32 %v223, 7
    %v225 = vsub.s32 0, %v224
    %v226 = vrot.slane %v221, %v225
    %v244 = vunpack.c.l.b16 %v205
    %v245 = vunpack.c.l.b16 %v206
    %v246 = vunpack.c.l.b16 %v207
    %v247 = vunpack.c.l.b16 %v208
    %v248 = vunpack.c.l.b16 %v209
    %v249 = vunpack.c.l.b16 %v210
    %v250 = vunpack.c.l.b16 %v211
    %v251 = vunpack.c.l.b16 %v212
    %v252 = vunpack.c.l.b16 %v213
    %v253 = vunpack.c.l.b16 %v214
    %v254 = vunpack.c.l.b16 %v215
    %v255 = vunpack.c.l.b16 %v216
    %v256 = vunpack.c.l.b16 %v217
    %v257 = vunpack.c.l.b16 %v218
    %v258 = vunpack.c.l.b16 %v219
    %v259 = vunpack.c.l.b16 %v220
    %v260 = vpack.c.b16 %v245, %v244
    %v261 = vpack.c.b16 %v247, %v246
    %v262 = vpack.c.b16 %v249, %v248
    %v263 = vpack.c.b16 %v251, %v250
    %v264 = vpack.c.b16 %v253, %v252
    %v265 = vpack.c.b16 %v255, %v254
    %v266 = vpack.c.b16 %v257, %v256
    %v267 = vpack.c.b16 %v259, %v258
    %276 = vmatprep.subr.bf16.mxu0 0
    %277 = vmatpush1.bf16.msra.mxu0 %v260
    %278 = vmatprep.subr.bf16.mxu0 0
    %279 = vmatpush1.bf16.msra.mxu0 %v261
    %280 = vmatprep.subr.bf16.mxu0 0
    %281 = vmatpush1.bf16.msra.mxu0 %v262
    %282 = vmatprep.subr.bf16.mxu0 0
    %283 = vmatpush1.bf16.msra.mxu0 %v263
    %284 = vmatprep.subr.bf16.mxu0 0
    %285 = vmatpush1.bf16.msra.mxu0 %v264
    %286 = vmatprep.subr.bf16.mxu0 0
    %287 = vmatpush1.bf16.msra.mxu0 %v265
    %288 = vmatprep.subr.bf16.mxu0 0
    %289 = vmatpush1.bf16.msra.mxu0 %v266
    %290 = vmatprep.subr.bf16.mxu0 0
    %291 = vmatpush1.bf16.msra.mxu0 %v267
    %292 = vmatprep.subr.bf16.mxu0 0
    %293 = vmatpush1.bf16.msra.mxu0 0
    %294 = vmatprep.subr.bf16.mxu0 0
    %295 = vmatpush1.bf16.msra.mxu0 0
    %296 = vmatprep.subr.bf16.mxu0 0
    %297 = vmatpush1.bf16.msra.mxu0 0
    %298 = vmatprep.subr.bf16.mxu0 0
    %299 = vmatpush1.bf16.msra.mxu0 0
    %300 = vmatprep.subr.bf16.mxu0 0
    %301 = vmatpush1.bf16.msra.mxu0 0
    %302 = vmatprep.subr.bf16.mxu0 0
    %303 = vmatpush1.bf16.msra.mxu0 0
    %304 = vmatprep.subr.bf16.mxu0 0
    %305 = vmatpush1.bf16.msra.mxu0 0
    %306 = vmatprep.subr.bf16.mxu0 0
    %307 = vmatpush1.bf16.msra.mxu0 0
    %308 = vmatprep.mubr.bf16.mxu0 0
    %309 = vmatmul.mubr.bf16.gmra.mrb[0].mxu0 %v204
    %v310 = vpop.f32.mrb[0].mxu0
    %v311 = vadd.f32 %v226, %v310
    %v312 = vpop.f32.mrb[0].mxu0
    %v313 = vpop.f32.mrb[0].mxu0
    %v314 = vpop.f32.mrb[0].mxu0
    %315 = vdwg.mxu0
    %v316 = vmax.f32 %v311, 0.0
    %v317 = vld [vmem:[%s10] sm:$0x1]
    %v319 = vlaneseq
    %v320 = vshrl.u32 %v319, 7
    %v321 = vsub.s32 0, %v320
    %v322 = vrot.slane %v317, %v321
    %v324 = vmul.f32 %v316, %v322
    %325 = vadd.xlane.f32.xlu0 %v324
    %v326 = vpop.xlane.xlu0 %325
    %v327 = vld [vmem:[#allocation2] sm:$0x1]
    %v329 = vlaneseq
    %v330 = vshrl.u32 %v329, 7
    %v331 = vsub.s32 0, %v330
    %v332 = vrot.slane %v327, %v331
    %v334 = vadd.f32 %v326, %v332
    %336 = vset.pattern.permute.xlu0 0
    %337 = vperm.xlu0 %336, %v334
    %v338 = vpop.permute.xlu0 %337
    %340 = vst [vmem:[#allocation6] sm:$0xff] %v338
    // Predicated region
    $region54: #{tpu_custom_call.1} parent=1 // pred_check
      _
    $region55: #{tpu_custom_call.1} parent=1 // pred_check_branch
      %342 = sbr.rel (0) target = $region57
    $region56: #{tpu_custom_call.1} parent=1 // pred_region
      %s344 = ssub.s32 128, 128
      %345 = vsyncadd [#allocation5], %s344
      %s347 = sshll.u32 [#allocation6], 4
      %s348 = int_to_ptr.vmem [resolvable:$true] %s347
      %350 = dma.vmem_to_hbm [thread:$0]  %s348, 128, %s12, [#allocation5]
    $region57: #{tpu_custom_call.1} parent=1 // pred_fallthru
      _
    // Predicated region
    $region58: #{tpu_custom_call.1} parent=1 // pred_check
      _
    $region59: #{tpu_custom_call.1} parent=1 // pred_check_branch
      %352 = sbr.rel (0) target = $region61
    $region60: #{tpu_custom_call.1} parent=1 // pred_region
      %353 = dma.done [#allocation5], 128
    $region61: #{tpu_custom_call.1} parent=1 // pred_fallthru
      _
    %354 = vsyncpa [#allocation4], 1
    %355 = vsyncpa [#allocation5], 1

</llo_original>
